<compile_context>
chip_gen: v7x
topology: tpu7x:2x2x1
jax: 0.10.0
libtpu: 0.0.40
codegen_flags: <defaults>
</compile_context>

<pallas_src>
import functools

import jax
import jax.numpy as jnp
from jax.experimental import pallas as pl
from jax.experimental.pallas import tpu as pltpu


def _id_kernel(x_ref, o_ref, *, activation):
    x = x_ref[...]
    if activation is not None:
        x = activation(x)                      # elementwise, VPU/EUP
    o_ref[...] = x.astype(o_ref.dtype)         # guard dtype-promoting activations


def _cdiv(a, b):
    return -(-a // b)


def _device_tuning():
    """Returns (block_bytes_target, vmem_cap_bytes, dual_tensorcore)."""
    kind = ""
    try:
        kind = jax.devices()[0].device_kind.lower()
    except Exception:
        pass
    if "v7" in kind:
        # 3.2 TB/s HBM: ~8 MiB blocks keep the ~0.35us/step overhead <10%.
        # 4 * 8 MiB + 4 MiB headroom = 36 MiB, under a 40 MiB cap (64 MiB VMEM).
        return 8 * 1024 * 1024, 40 * 1024 * 1024, True
    # v5e / v6e: 4 MiB blocks; 128 MiB physical VMEM so a 48 MiB cap is safe.
    return 4 * 1024 * 1024, 48 * 1024 * 1024, False


def id_layer(x, activation=None, *, small_bytes_threshold=512 * 1024,
             block_bytes_target=None, donate_input=False):
    """Pallas implementation of IdLayer.forward.

    x: any-shape array (e.g. NCHW). activation: optional *elementwise* jnp
    function applied inside the kernel; None -> pure identity (no kernel).
    """
    # --- Identity path: launching a copy kernel would be pure HBM waste. ---
    if activation is None:
        return x

    orig_shape = x.shape
    dtype = x.dtype
    total = int(x.size)
    itemsize = jnp.dtype(dtype).itemsize

    # --- Tiny inputs: XLA's fused elementwise op is strictly faster. ---
    if total == 0 or total * itemsize < small_bytes_threshold:
        return activation(x)

    # --- Ragged element counts (not a multiple of 128): a lane-dense kernel
    # would need wrapper-side pad + slice (or a concat to stitch a tail), each
    # a full extra HBM pass that multiplies traffic of this streaming op. XLA's
    # fused elementwise is already one read + one write, so use it.
    # TODO(synk): memory_space=pl.ANY + manual-DMA path if a pure-Pallas
    # implementation is ever required for ragged totals.
    if total % 128 != 0:
        return activation(x)

    dev_block_bytes, vmem_cap, dual_tc = _device_tuning()
    if block_bytes_target is None:
        block_bytes_target = dev_block_bytes

    # Sublane packing: 8 rows for 32-bit, 16 for bf16, 32 for int8/fp8.
    sublane = max(8, 32 // max(itemsize, 1))

    # Lane-dense width L (multiple of 128); prefer wide slabs (unmasked vst).
    L = 128
    for cand in (2048, 1024, 512, 256, 128):
        if total % cand == 0:
            L = cand
            break
    rows = total // L

    # Row tile: sublane-aligned, sized toward block_bytes_target.
    # tr == rows (full array dim) is always a legal block shape.
    tr = max(sublane, block_bytes_target // (L * itemsize))
    tr = (tr // sublane) * sublane
    tr = min(tr, rows)

    # v7x: make sure the "parallel" grid axis has enough steps for both
    # TensorCores on mid-size tensors.
    if dual_tc and rows >= 2 * sublane:
        min_steps = 4 if rows >= 4 * sublane else 2
        cap_tr = max(sublane, ((rows // min_steps) // sublane) * sublane)
        tr = min(tr, cap_tr)

    grid = (_cdiv(rows, tr),)    # partial trailing block is masked by Pallas
    x2 = x.reshape(rows, L)      # contiguous -> metadata-only reshape

    block_bytes = tr * L * itemsize
    vmem_limit_bytes = min(vmem_cap,
                           max(16 * 1024 * 1024, 4 * block_bytes + (4 << 20)))

    kernel = functools.partial(_id_kernel, activation=activation)
    out2 = pl.pallas_call(
        kernel,
        out_shape=jax.ShapeDtypeStruct((rows, L), dtype),
        grid_spec=pltpu.PrefetchScalarGridSpec(
            num_scalar_prefetch=0,
            grid=grid,
            in_specs=[pl.BlockSpec((tr, L), lambda i: (i, 0))],
            out_specs=pl.BlockSpec((tr, L), lambda i: (i, 0)),
        ),
        compiler_params=pltpu.CompilerParams(
            dimension_semantics=("parallel",),
            vmem_limit_bytes=vmem_limit_bytes,
        ),
        # Advisory only: memory-bound streaming op; transcendental count is an
        # upper bound (depends on the supplied activation).
        cost_estimate=pl.CostEstimate(
            flops=total,
            transcendentals=total,
            bytes_accessed=2 * total * itemsize,
        ),
        # Optional in-place update when the caller can donate its buffer.
        input_output_aliases=({0: 0} if donate_input else {}),
    )(x2)
    return out2.reshape(orig_shape)


if __name__ == "__main__":
    key = jax.random.PRNGKey(0)
    k0, k1, k2, k3 = jax.random.split(key, 4)

    # Case 1: small NCHW input, activation=None -> pure identity (no kernel).
    x = jax.random.normal(k0, (2, 4, 16, 16), dtype=jnp.float32)
    y = id_layer(x, activation=None)
    jax.block_until_ready(y)
    assert y.shape == x.shape and y.dtype == x.dtype
    assert bool(jnp.array_equal(y, x))

    # Case 2: same small input + ReLU. Default threshold -> fused XLA fast
    # path; threshold=0 forces the lane-dense Pallas kernel (single block).
    relu = lambda v: jnp.maximum(v, 0.0)
    y_fast = id_layer(x, activation=relu)
    y_kern = id_layer(x, activation=relu, small_bytes_threshold=0)
    jax.block_until_ready((y_fast, y_kern))
    ref = jnp.maximum(x, 0.0)
    assert y_kern.shape == x.shape and y_kern.dtype == x.dtype
    assert jnp.allclose(y_fast, ref) and jnp.allclose(y_kern, ref)

    # Case 3: larger tensor -> multi-block lane-dense Pallas path with a
    # masked partial trailing block; no wrapper-side pad/slice copies.
    xb = jax.random.normal(k1, (10, 96, 32, 32), dtype=jnp.float32)
    yb = id_layer(xb, activation=jnp.tanh, block_bytes_target=1 << 20)
    jax.block_until_ready(yb)
    assert yb.shape == xb.shape and yb.dtype == xb.dtype
    assert jnp.allclose(yb, jnp.tanh(xb), atol=1e-5)

    # Case 4: bf16 input with an activation that promotes to f32 internally;
    # the in-kernel astype casts the result back to the output dtype.
    xh = jax.random.normal(k2, (8, 64, 32, 32), dtype=jnp.bfloat16)
    act_promote = lambda v: jnp.tanh(v.astype(jnp.float32))
    yh = id_layer(xh, activation=act_promote, small_bytes_threshold=0)
    jax.block_until_ready(yh)
    assert yh.shape == xh.shape and yh.dtype == jnp.bfloat16
    ref_h = jnp.tanh(xh.astype(jnp.float32)).astype(jnp.bfloat16)
    assert jnp.allclose(yh.astype(jnp.float32), ref_h.astype(jnp.float32),
                        atol=2e-2)

    # Case 5: ragged element count (not a multiple of 128) -> fused XLA path
    # (no pad / slice round-trips).
    xo = jax.random.normal(k3, (3, 5, 7, 13), dtype=jnp.float32)
    yo = id_layer(xo, activation=jnp.tanh)
    jax.block_until_ready(yo)
    assert yo.shape == xo.shape and jnp.allclose(yo, jnp.tanh(xo), atol=1e-5)

    print("KERNEL_OK")
</pallas_src>

<mosaic_0001>
module attributes {stable_mosaic.version = 11 : i64} {
  func.func @_id_kernel(%arg0: i32, %arg1: memref<1x2048xf32, #tpu.memory_space<vmem>>, %arg2: memref<1x2048xf32, #tpu.memory_space<vmem>>) attributes {dimension_semantics = [#tpu.dimension_semantics<parallel>], iteration_bounds = array<i64: 1>, scalar_prefetch = 0 : i64, scratch_operands = 0 : i64, tpu.core_type = #tpu.core_type<tc>, window_params = [{transform_indices = @transform_0, window_bounds = array<i64: 1, 2048>}, {transform_indices = @transform_1, window_bounds = array<i64: 1, 2048>}]} {
    %c0 = arith.constant 0 : index
    %c0_0 = arith.constant 0 : index
    %0 = vector.load %arg1[%c0, %c0_0] : memref<1x2048xf32, #tpu.memory_space<vmem>>, vector<1x2048xf32>
    %cst = arith.constant 0.000000e+00 : f32
    %1 = vector.broadcast %cst : f32 to vector<1x2048xf32>
    %2 = arith.maximumf %0, %1 : vector<1x2048xf32>
    %c0_1 = arith.constant 0 : index
    %c0_2 = arith.constant 0 : index
    %3 = vector.load %arg2[%c0_1, %c0_2] : memref<1x2048xf32, #tpu.memory_space<vmem>>, vector<1x2048xf32>
    tpu.vector_store %arg2[%c0_1, %c0_2], %2 {strides = array<i32>} : memref<1x2048xf32, #tpu.memory_space<vmem>>, vector<1x2048xf32>,
    return
  }
  func.func @transform_0(%arg0: i32) -> (i32, i32) {
    %c0_i32 = arith.constant 0 : i32
    %c0_i32_0 = arith.constant 0 : i32
    return %arg0, %c0_i32 : i32, i32
  }
  func.func @transform_1(%arg0: i32) -> (i32, i32) {
    %c0_i32 = arith.constant 0 : i32
    %c0_i32_0 = arith.constant 0 : i32
    return %arg0, %c0_i32 : i32, i32
  }
}

</mosaic_0001>

<llo_original>
// kernel: tpu_custom_call.1
$region0: #{tpu_custom_call.1}
  #allocation0 [shape = 'u32[]', space=smem, size = 0x4, offset = 0x4, fixed_abs, tag = 'smem constant byte address 0x4 - core index']
  #allocation1 [shape = 'u32[144,128]{1,0:T(1,128)}', space=vmem, size = 0x12000, scoped, tag = 'internal scratch']
  %s0 = inlined_call_operand.hbm [shape: f32[1,2048], index: 0, kind: input, shape index: {}]
  %s1 = inlined_call_operand.hbm [shape: f32[1,2048], index: 1, kind: output, shape index: {}]
  %s2 = sld [smem:[#allocation0]]
  $region18: #{tpu_custom_call.1} parent=0
    _
  %s4 = ssub.s32 1, %s2
  %s5 = scalar_select 0, %s4, %s2
  $region1: #{tpu_custom_call.1} parent=0
    #allocation2 [shape = 'u8[8192]{0}', space=vmem, size = 0x2000, scoped, tag = 'input window, operand 0, single buffered']
    #allocation3 [shape = 's32[1]{0}', space=sflag, size = 0x4, scoped, tag = 'scoped memory for tpu_custom_call.1']
    #allocation4 [shape = 's32[1]{0}', space=sflag, size = 0x4, scoped, tag = 'scoped memory for tpu_custom_call.1']
    #allocation5 [shape = 'u8[8192]{0}', space=vmem, size = 0x2000, scoped, tag = 'output window, operand 0, single buffered']
    %6 = vsyncpa [#allocation3], 0
    %7 = vsyncpa [#allocation4], 0
    // Predicated region
    $region2: #{tpu_custom_call.1} parent=1 // pred_check
      _
    $region3: #{tpu_custom_call.1} parent=1 // pred_check_branch
      %9 = sbr.rel (0) target = $region5
    $region4: #{tpu_custom_call.1} parent=1 // pred_region
      %s11 = ssub.s32 256, 256
      %12 = vsyncadd [#allocation3], %s11
      %s14 = sshll.u32 [#allocation2], 4
      %s15 = int_to_ptr.vmem [resolvable:$true] %s14
      %17 = dma.hbm_to_vmem [thread:$0]  %s0, 256, %s15, [#allocation3]
    $region5: #{tpu_custom_call.1} parent=1 // pred_fallthru
      _
    // Predicated region
    $region6: #{tpu_custom_call.1} parent=1 // pred_check
      _
    $region7: #{tpu_custom_call.1} parent=1 // pred_check_branch
      %19 = sbr.rel (0) target = $region9
    $region8: #{tpu_custom_call.1} parent=1 // pred_region
      %20 = dma.done [#allocation3], 256
    $region9: #{tpu_custom_call.1} parent=1 // pred_fallthru
      _
    %v21 = vld [vmem:[#allocation2] sm:$0xff]
    %v22 = vld [vmem:[#allocation2 + $0x8] sm:$0xff]
    %v23 = vmax.f32 %v21, 0.0
    %v24 = vmax.f32 %v22, 0.0
    %25 = vst [vmem:[#allocation5] sm:$0xff] %v23
    %26 = vst [vmem:[#allocation5 + $0x8] sm:$0xff] %v24
    // Predicated region
    $region10: #{tpu_custom_call.1} parent=1 // pred_check
      _
    $region11: #{tpu_custom_call.1} parent=1 // pred_check_branch
      %28 = sbr.rel (0) target = $region13
    $region12: #{tpu_custom_call.1} parent=1 // pred_region
      %s30 = ssub.s32 256, 256
      %31 = vsyncadd [#allocation4], %s30
      %s33 = sshll.u32 [#allocation5], 4
      %s34 = int_to_ptr.vmem [resolvable:$true] %s33
      %36 = dma.vmem_to_hbm [thread:$0]  %s34, 256, %s1, [#allocation4]
    $region13: #{tpu_custom_call.1} parent=1 // pred_fallthru
      _
    // Predicated region
    $region14: #{tpu_custom_call.1} parent=1 // pred_check
      _
    $region15: #{tpu_custom_call.1} parent=1 // pred_check_branch
      %38 = sbr.rel (0) target = $region17
    $region16: #{tpu_custom_call.1} parent=1 // pred_region
      %39 = dma.done [#allocation4], 256
    $region17: #{tpu_custom_call.1} parent=1 // pred_fallthru
      _
    %40 = vsyncpa [#allocation3], 1
    %41 = vsyncpa [#allocation4], 1

</llo_original>
